<compile_context>
chip_gen: v7x
topology: tpu7x:2x2x1
jax: 0.10.0
libtpu: 0.0.40
codegen_flags: <defaults>
</compile_context>

<pallas_src>
import functools

import jax
import jax.numpy as jnp
from jax import lax
from jax.experimental import pallas as pl
from jax.experimental.pallas import tpu as pltpu


def _round_up(x, m):
    return (x + m - 1) // m * m


# --------------------------- hardware detection ---------------------------- #
def _tpu_hw():
    """Returns (vmem_capacity_bytes, tensorcores_per_device, detected)."""
    vmem_cap, num_cores, detected = 64 * 2**20, 1, False   # conservative (v7x-sized)
    try:
        info = pltpu.get_tpu_info()
        cap = getattr(info, "vmem_capacity_bytes", None)
        if cap:
            vmem_cap, detected = int(cap), True
        for attr in ("num_cores", "num_tensorcores", "tensorcore_count", "cores_per_chip"):
            v = getattr(info, attr, None)
            if v:
                num_cores = int(v)
                break
    except Exception:
        pass
    if num_cores <= 1:
        try:
            kind = jax.devices()[0].device_kind.lower()
            if any(t in kind for t in ("v4", "v5p", "v7", "7x")):
                num_cores = 2
        except Exception:
            pass
    return vmem_cap, max(1, min(num_cores, 2)), detected


# ----------------------------- Pallas kernel ------------------------------- #
def _gradalign_partial_kernel(g1_ref, g2_ref, out_ref, acc_ref, *,
                              kt, tile, extent, mask_axis, needs_mask):
    """Per-sample partial reductions for one (shard, b-tile).

    acc_ref : VMEM (3, b_tile, lane) f32 lane-wise partials of
              [<g1,g2>, ||g1||^2, ||g2||^2]; only the sublane/row axis is
              reduced per step.  The cross-lane reduce and the narrow
              (3, b_tile) output store happen once, at k == kt - 1.
    """
    k = pl.program_id(2)

    @pl.when(k == 0)
    def _init():
        acc_ref[...] = jnp.zeros_like(acc_ref)

    g1 = g1_ref[...].astype(jnp.float32)
    g2 = g2_ref[...].astype(jnp.float32)

    if needs_mask:
        # Tail / over-coverage steps: zero elements past the true extent.
        # jnp.where (not multiply) so uninitialized-pad NaNs cannot leak in.
        s = pl.program_id(0)
        off = (s * kt + k) * tile
        idx = lax.broadcasted_iota(jnp.int32, g1.shape, mask_axis) + off
        keep = idx < extent
        g1 = jnp.where(keep, g1, 0.0)
        g2 = jnp.where(keep, g2, 0.0)

    acc_ref[0] += jnp.sum(g1 * g2, axis=1)
    acc_ref[1] += jnp.sum(g1 * g1, axis=1)
    acc_ref[2] += jnp.sum(g2 * g2, axis=1)

    @pl.when(k == kt - 1)
    def _finalize():
        out_ref[0, 0] = jnp.sum(acc_ref[...], axis=-1)   # (3, b_tile)


# ------------------------------- wrapper ------------------------------------ #
def grad_align_reg(grad1_nchw, grad2_nchw, reg_lambda, *, tile_override=None):
    """reg = reg_lambda * (1 - mean_b cos(grad1_b, grad2_b)) over nonzero-grad rows."""
    # NOTE: static Python branch; reg_lambda stays a static float (module config).
    if reg_lambda <= 0:
        return jnp.zeros((), jnp.float32)

    B = grad1_nchw.shape[0]
    D = int(grad1_nchw.size // B)
    dtype = grad1_nchw.dtype
    itemsize = jnp.dtype(dtype).itemsize
    sub = {4: 8, 2: 16, 1: 32}.get(itemsize, 8)

    # Free row-major view (no padding copy).
    if D % 128 == 0:
        R, L, ax, quantum = D // 128, 128, 1, sub            # sublane-dense layout
        bytes_per_unit = 128 * itemsize
        min_tile = max(sub, _round_up(8192 // (128 * itemsize), sub))
    else:
        R, L, ax, quantum = 1, D, 2, 128                      # lane-tiled fallback
        bytes_per_unit = itemsize
        min_tile = max(128, _round_up(8192 // itemsize, 128))
    extent = R if ax == 1 else L
    g1 = grad1_nchw.reshape(B, R, L)
    g2 = grad2_nchw.reshape(B, R, L)

    vmem_cap, num_cores, hw_detected = _tpu_hw()
    big_vmem = hw_detected and vmem_cap >= 100 * 2**20
    target_block = (16 if big_vmem else 6) * 2**20

    # ---- choose (b_tile, tile): biggest blocks that keep per-row DMA chunks
    # >= ~8 KiB and fit this generation's VMEM budget ---------------------------
    min_tile = min(min_tile, _round_up(extent, quantum))
    if B * min_tile * bytes_per_unit > target_block:
        b_tile = max(1, target_block // (min_tile * bytes_per_unit))   # tile B instead
        tile = min_tile
    else:
        b_tile = B
        tile = max(min_tile, (target_block // (B * bytes_per_unit)) // quantum * quantum)
    if num_cores > 1:   # don't allocate more than one shard's worth per block
        tile = max(min_tile, min(tile, _round_up(pl.cdiv(extent, num_cores), quantum)))
    tile = extent if tile >= extent else max(quantum, tile // quantum * quantum)
    if tile_override is not None:
        tile = int(tile_override)
        assert tile == extent or (tile % quantum == 0 and tile < extent), (tile, extent, quantum)

    nb = pl.cdiv(extent, tile)                  # blocks along the reduced axis
    num_shards = max(1, min(num_cores, nb))     # "parallel" axis = TensorCores
    kt = pl.cdiv(nb, num_shards)                # reduction steps per shard
    bt = pl.cdiv(B, b_tile)
    needs_clamp = num_shards * kt > nb          # grid over-covers -> clamp index
    needs_mask = num_shards * kt * tile != extent

    # ---- block specs -----------------------------------------------------------
    if ax == 1:
        in_block = (b_tile, tile, 128)
        if needs_clamp:
            in_map = lambda s, b, k: (b, jnp.minimum(s * kt + k, nb - 1), 0)
        else:
            in_map = lambda s, b, k: (b, s * kt + k, 0)
        acc_lane = 128
        phys_block = b_tile * _round_up(tile, sub) * 128 * itemsize
    else:
        in_block = (b_tile, 1, tile)
        if needs_clamp:
            in_map = lambda s, b, k: (b, 0, jnp.minimum(s * kt + k, nb - 1))
        else:
            in_map = lambda s, b, k: (b, 0, s * kt + k)
        acc_lane = tile
        phys_block = b_tile * sub * _round_up(tile, 128) * itemsize

    # 3-deep input buffering only on positively-detected small-VMEM chips (v7x).
    buffers = 3 if (hw_detected and vmem_cap < 100 * 2**20 and kt >= 3) else 2

    def _in_spec():
        if buffers > 2:
            try:
                return pl.BlockSpec(in_block, in_map, pipeline_mode=pl.Buffered(buffers))
            except TypeError:
                pass
        return pl.BlockSpec(in_block, in_map)

    # Physical (sublane-padded) footprint: 2 inputs x buffer_count + headroom.
    vmem_limit = 2 * buffers * phys_block + 8 * 2**20
    vmem_limit = int(max(32 * 2**20, min(vmem_limit, vmem_cap - 16 * 2**20)))

    parts = pl.pallas_call(
        functools.partial(
            _gradalign_partial_kernel,
            kt=kt, tile=tile, extent=extent, mask_axis=ax, needs_mask=needs_mask),
        out_shape=jax.ShapeDtypeStruct((num_shards, bt, 3, b_tile), jnp.float32),
        grid=(num_shards, bt, kt),
        in_specs=[_in_spec(), _in_spec()],
        out_specs=pl.BlockSpec((1, 1, 3, b_tile), lambda s, b, k: (s, b, 0, 0)),
        scratch_shapes=[pltpu.VMEM((3, b_tile, acc_lane), jnp.float32)],
        compiler_params=pltpu.CompilerParams(
            dimension_semantics=("parallel", "parallel", "arbitrary"),
            vmem_limit_bytes=vmem_limit,
        ),
        cost_estimate=pl.CostEstimate(
            flops=6 * B * D,
            transcendentals=0,
            bytes_accessed=2 * B * D * itemsize + num_shards * bt * 3 * b_tile * 4,
        ),
    )(g1, g2)

    # Tiny O(B) cross-shard combine in plain JAX.
    totals = jnp.sum(parts, axis=0)                               # (bt, 3, b_tile)
    totals = jnp.moveaxis(totals, 1, 2).reshape(bt * b_tile, 3)[:B]
    dot, n1sq, n2sq = totals[:, 0], totals[:, 1], totals[:, 2]

    # grads_nnz_idx = (||g1|| != 0) & (||g2|| != 0)
    nnz = jnp.logical_and(n1sq > 0.0, n2sq > 0.0)
    inv1 = lax.rsqrt(jnp.where(nnz, n1sq, 1.0))
    inv2 = lax.rsqrt(jnp.where(nnz, n2sq, 1.0))
    cos = jnp.where(nnz, dot * inv1 * inv2, 0.0)
    count = jnp.sum(nnz.astype(jnp.float32))
    # NaN when no nonzero-grad rows, matching torch `cos.mean()` on empty select.
    mean_cos = jnp.sum(cos) / count
    return jnp.float32(reg_lambda) * (1.0 - mean_cos)


# ------------------------------- JAX glue ------------------------------------ #
# Tiny deterministic "model": flatten + linear classifier (stand-in for the
# nn.Module passed into GradAlign.forward).
def init_model_params(key, in_features, num_classes):
    kw, kb = jax.random.split(key)
    W = jax.random.normal(kw, (in_features, num_classes), jnp.float32) * 0.05
    b = jax.random.normal(kb, (num_classes,), jnp.float32) * 0.05
    return {"W": W, "b": b}


def model_apply(params, x_nchw):
    B = x_nchw.shape[0]
    flat = x_nchw.reshape(B, -1)
    return flat @ params["W"] + params["b"]


def cross_entropy(logits, labels):
    logp = jax.nn.log_softmax(logits, axis=-1)
    return -jnp.mean(jnp.take_along_axis(logp, labels[:, None], axis=-1))


def input_grad(params, X, y, delta):
    """grad of CE(model(X + delta), y) w.r.t. delta (torch.autograd.grad analog)."""
    def loss_fn(d):
        return cross_entropy(model_apply(params, X + d), y)
    return jax.grad(loss_fn)(delta)


# --------------------------------- main -------------------------------------- #
if __name__ == "__main__":
    # D = 4*24*24 = 2304 = 18 * 128: exercises the sublane-dense layout, a
    # multi-step reduction grid (with tile_override), the in-kernel tail mask
    # (18 % 8 != 0) and -- on 2-TC chips -- the over-coverage clamp, all with
    # zero padding copies.
    B, C, H, W = 2, 4, 24, 24
    num_classes = 10
    reg_lambda = 0.2
    epsilon = 8.0 / 255.0

    key = jax.random.PRNGKey(0)
    k_x, k_y, k_d1, k_d2, k_m = jax.random.split(key, 5)

    X = jax.random.normal(k_x, (B, C, H, W), jnp.float32)
    y = jax.random.randint(k_y, (B,), 0, num_classes)
    params = init_model_params(k_m, C * H * W, num_classes)

    # grad1: gradient of the training loss w.r.t. the adversarial delta
    delta1 = epsilon * jnp.sign(jax.random.normal(k_d1, (B, C, H, W), jnp.float32))
    grad1 = input_grad(params, X, y, delta1)

    # grad2: __get_input_grad -- gradient at a uniform(-eps, eps) perturbation
    delta2 = jax.random.uniform(
        k_d2, (B, C, H, W), jnp.float32, minval=-epsilon, maxval=epsilon
    )
    grad2 = input_grad(params, X, y, delta2)

    # tile_override=8 keeps the test grid multi-step (the auto-sizer would pick
    # one full-extent block at this tiny D); real shapes use the auto tiling.
    reg = grad_align_reg(grad1, grad2, reg_lambda, tile_override=8)
    jax.block_until_ready(reg)

    # sanity check vs. pure-JAX reference (same math as the torch module)
    g1f = grad1.reshape(B, -1).astype(jnp.float32)
    g2f = grad2.reshape(B, -1).astype(jnp.float32)
    n1 = jnp.sqrt(jnp.sum(g1f * g1f, axis=-1))
    n2 = jnp.sqrt(jnp.sum(g2f * g2f, axis=-1))
    nnz = (n1 != 0) & (n2 != 0)
    cos_ref = jnp.sum((g1f / n1[:, None]) * (g2f / n2[:, None]), axis=-1)
    reg_ref = reg_lambda * (1.0 - jnp.mean(cos_ref[nnz]))
    assert jnp.allclose(reg, reg_ref, atol=1e-4, rtol=1e-4), (reg, reg_ref)

    print("KERNEL_OK")
</pallas_src>

<mosaic_0001>
module attributes {stable_mosaic.version = 11 : i64} {
  func.func @_gradalign_partial_kernel(%arg0: i32, %arg1: i32, %arg2: i32, %arg3: memref<2x8x128xf32, #tpu.memory_space<vmem>>, %arg4: memref<2x8x128xf32, #tpu.memory_space<vmem>>, %arg5: memref<1x1x3x2xf32, #tpu.memory_space<vmem>>, %arg6: memref<3x2x128xf32, #tpu.memory_space<vmem>>) attributes {dimension_semantics = [#tpu.dimension_semantics<parallel>, #tpu.dimension_semantics<parallel>, #tpu.dimension_semantics<arbitrary>], iteration_bounds = array<i64: 1, 1, 3>, scalar_prefetch = 0 : i64, scratch_operands = 1 : i64, tpu.core_type = #tpu.core_type<tc>, window_params = [{transform_indices = @transform_0, window_bounds = array<i64: 2, 8, 128>}, {transform_indices = @transform_1, window_bounds = array<i64: 2, 8, 128>}, {transform_indices = @transform_2, window_bounds = array<i64: 1, 1, 3, 2>}]} {
    %c0_i32 = arith.constant 0 : i32
    %0 = arith.cmpi eq, %arg2, %c0_i32 : i32
    %1 = arith.extui %0 : i1 to i32
    %c0_i32_0 = arith.constant 0 : i32
    %2 = arith.cmpi ne, %1, %c0_i32_0 : i32
    scf.if %2 {
      %cst_27 = arith.constant 0.000000e+00 : f32
      %44 = vector.broadcast %cst_27 : f32 to vector<3x2x128xf32>
      %c0_28 = arith.constant 0 : index
      %c0_29 = arith.constant 0 : index
      %c0_30 = arith.constant 0 : index
      %45 = vector.load %arg6[%c0_28, %c0_29, %c0_30] : memref<3x2x128xf32, #tpu.memory_space<vmem>>, vector<3x2x128xf32>
      tpu.vector_store %arg6[%c0_28, %c0_29, %c0_30], %44 {strides = array<i32>} : memref<3x2x128xf32, #tpu.memory_space<vmem>>, vector<3x2x128xf32>,
    } else {
    }
    %c0 = arith.constant 0 : index
    %c0_1 = arith.constant 0 : index
    %c0_2 = arith.constant 0 : index
    %3 = vector.load %arg3[%c0, %c0_1, %c0_2] : memref<2x8x128xf32, #tpu.memory_space<vmem>>, vector<2x8x128xf32>
    %c0_3 = arith.constant 0 : index
    %c0_4 = arith.constant 0 : index
    %c0_5 = arith.constant 0 : index
    %4 = vector.load %arg4[%c0_3, %c0_4, %c0_5] : memref<2x8x128xf32, #tpu.memory_space<vmem>>, vector<2x8x128xf32>
    %c3_i32 = arith.constant 3 : i32
    %5 = arith.muli %arg0, %c3_i32 : i32
    %6 = arith.addi %5, %arg2 : i32
    %c8_i32 = arith.constant 8 : i32
    %7 = arith.muli %6, %c8_i32 : i32
    %8 = tpu.iota {dimensions = array<i32: 1>} : vector<2x8x128xi32>
    %9 = vector.broadcast %7 : i32 to vector<2x8x128xi32>
    %10 = arith.addi %8, %9 : vector<2x8x128xi32>
    %c18_i32 = arith.constant 18 : i32
    %11 = vector.broadcast %c18_i32 : i32 to vector<2x8x128xi32>
    %12 = arith.cmpi slt, %10, %11 : vector<2x8x128xi32>
    %cst = arith.constant 0.000000e+00 : f32
    %13 = vector.broadcast %cst : f32 to vector<2x8x128xf32>
    %14 = arith.select %12, %3, %13 : vector<2x8x128xi1>, vector<2x8x128xf32>
    %cst_6 = arith.constant 0.000000e+00 : f32
    %15 = vector.broadcast %cst_6 : f32 to vector<2x8x128xf32>
    %16 = arith.select %12, %4, %15 : vector<2x8x128xi1>, vector<2x8x128xf32>
    %c0_7 = arith.constant 0 : index
    %c0_8 = arith.constant 0 : index
    %c0_9 = arith.constant 0 : index
    %17 = vector.load %arg6[%c0_7, %c0_8, %c0_9] : memref<3x2x128xf32, #tpu.memory_space<vmem>>, vector<1x2x128xf32>
    %18 = vector.shape_cast %17 : vector<1x2x128xf32> to vector<2x128xf32>
    %19 = arith.mulf %14, %16 : vector<2x8x128xf32>
    %cst_10 = arith.constant dense<0.000000e+00> : vector<2x128xf32>
    %20 = vector.multi_reduction <add>, %19, %cst_10 [1] : vector<2x8x128xf32> to vector<2x128xf32>
    %21 = arith.addf %18, %20 : vector<2x128xf32>
    %c0_11 = arith.constant 0 : index
    %c0_12 = arith.constant 0 : index
    %c0_13 = arith.constant 0 : index
    %22 = vector.load %arg6[%c0_11, %c0_12, %c0_13] : memref<3x2x128xf32, #tpu.memory_space<vmem>>, vector<1x2x128xf32>
    %23 = vector.shape_cast %22 : vector<1x2x128xf32> to vector<2x128xf32>
    %24 = vector.shape_cast %21 : vector<2x128xf32> to vector<1x2x128xf32>
    tpu.vector_store %arg6[%c0_11, %c0_12, %c0_13], %24 {strides = array<i32>} : memref<3x2x128xf32, #tpu.memory_space<vmem>>, vector<1x2x128xf32>,
    %c1 = arith.constant 1 : index
    %c0_14 = arith.constant 0 : index
    %c0_15 = arith.constant 0 : index
    %25 = vector.load %arg6[%c1, %c0_14, %c0_15] : memref<3x2x128xf32, #tpu.memory_space<vmem>>, vector<1x2x128xf32>
    %26 = vector.shape_cast %25 : vector<1x2x128xf32> to vector<2x128xf32>
    %27 = arith.mulf %14, %14 : vector<2x8x128xf32>
    %cst_16 = arith.constant dense<0.000000e+00> : vector<2x128xf32>
    %28 = vector.multi_reduction <add>, %27, %cst_16 [1] : vector<2x8x128xf32> to vector<2x128xf32>
    %29 = arith.addf %26, %28 : vector<2x128xf32>
    %c1_17 = arith.constant 1 : index
    %c0_18 = arith.constant 0 : index
    %c0_19 = arith.constant 0 : index
    %30 = vector.load %arg6[%c1_17, %c0_18, %c0_19] : memref<3x2x128xf32, #tpu.memory_space<vmem>>, vector<1x2x128xf32>
    %31 = vector.shape_cast %30 : vector<1x2x128xf32> to vector<2x128xf32>
    %32 = vector.shape_cast %29 : vector<2x128xf32> to vector<1x2x128xf32>
    tpu.vector_store %arg6[%c1_17, %c0_18, %c0_19], %32 {strides = array<i32>} : memref<3x2x128xf32, #tpu.memory_space<vmem>>, vector<1x2x128xf32>,
    %c2 = arith.constant 2 : index
    %c0_20 = arith.constant 0 : index
    %c0_21 = arith.constant 0 : index
    %33 = vector.load %arg6[%c2, %c0_20, %c0_21] : memref<3x2x128xf32, #tpu.memory_space<vmem>>, vector<1x2x128xf32>
    %34 = vector.shape_cast %33 : vector<1x2x128xf32> to vector<2x128xf32>
    %35 = arith.mulf %16, %16 : vector<2x8x128xf32>
    %cst_22 = arith.constant dense<0.000000e+00> : vector<2x128xf32>
    %36 = vector.multi_reduction <add>, %35, %cst_22 [1] : vector<2x8x128xf32> to vector<2x128xf32>
    %37 = arith.addf %34, %36 : vector<2x128xf32>
    %c2_23 = arith.constant 2 : index
    %c0_24 = arith.constant 0 : index
    %c0_25 = arith.constant 0 : index
    %38 = vector.load %arg6[%c2_23, %c0_24, %c0_25] : memref<3x2x128xf32, #tpu.memory_space<vmem>>, vector<1x2x128xf32>
    %39 = vector.shape_cast %38 : vector<1x2x128xf32> to vector<2x128xf32>
    %40 = vector.shape_cast %37 : vector<2x128xf32> to vector<1x2x128xf32>
    tpu.vector_store %arg6[%c2_23, %c0_24, %c0_25], %40 {strides = array<i32>} : memref<3x2x128xf32, #tpu.memory_space<vmem>>, vector<1x2x128xf32>,
    %c2_i32 = arith.constant 2 : i32
    %41 = arith.cmpi eq, %arg2, %c2_i32 : i32
    %42 = arith.extui %41 : i1 to i32
    %c0_i32_26 = arith.constant 0 : i32
    %43 = arith.cmpi ne, %42, %c0_i32_26 : i32
    scf.if %43 {
      %c0_27 = arith.constant 0 : index
      %c0_28 = arith.constant 0 : index
      %c0_29 = arith.constant 0 : index
      %44 = vector.load %arg6[%c0_27, %c0_28, %c0_29] : memref<3x2x128xf32, #tpu.memory_space<vmem>>, vector<3x2x128xf32>
      %cst_30 = arith.constant dense<0.000000e+00> : vector<3x2xf32>
      %45 = vector.multi_reduction <add>, %44, %cst_30 [2] : vector<3x2x128xf32> to vector<3x2xf32>
      %c0_31 = arith.constant 0 : index
      %c0_32 = arith.constant 0 : index
      %c0_33 = arith.constant 0 : index
      %c0_34 = arith.constant 0 : index
      %46 = vector.load %arg5[%c0_31, %c0_32, %c0_33, %c0_34] : memref<1x1x3x2xf32, #tpu.memory_space<vmem>>, vector<1x1x3x2xf32>
      %47 = vector.shape_cast %46 : vector<1x1x3x2xf32> to vector<3x2xf32>
      %48 = vector.shape_cast %45 : vector<3x2xf32> to vector<1x1x3x2xf32>
      tpu.vector_store %arg5[%c0_31, %c0_32, %c0_33, %c0_34], %48 {strides = array<i32>} : memref<1x1x3x2xf32, #tpu.memory_space<vmem>>, vector<1x1x3x2xf32>,
    } else {
    }
    return
  }
  func.func @transform_0(%arg0: i32, %arg1: i32, %arg2: i32) -> (i32, i32, i32) {
    %c3_i32 = arith.constant 3 : i32
    %0 = arith.muli %arg0, %c3_i32 : i32
    %1 = arith.addi %0, %arg2 : i32
    %c0_i32 = arith.constant 0 : i32
    %c0_i32_0 = arith.constant 0 : i32
    return %arg1, %1, %c0_i32 : i32, i32, i32
  }
  func.func @transform_1(%arg0: i32, %arg1: i32, %arg2: i32) -> (i32, i32, i32) {
    %c3_i32 = arith.constant 3 : i32
    %0 = arith.muli %arg0, %c3_i32 : i32
    %1 = arith.addi %0, %arg2 : i32
    %c0_i32 = arith.constant 0 : i32
    %c0_i32_0 = arith.constant 0 : i32
    return %arg1, %1, %c0_i32 : i32, i32, i32
  }
  func.func @transform_2(%arg0: i32, %arg1: i32, %arg2: i32) -> (i32, i32, i32, i32) {
    %c0_i32 = arith.constant 0 : i32
    %c0_i32_0 = arith.constant 0 : i32
    %c0_i32_1 = arith.constant 0 : i32
    return %arg0, %arg1, %c0_i32, %c0_i32_0 : i32, i32, i32, i32
  }
}

</mosaic_0001>

<llo_original>
// kernel: tpu_custom_call.1
$region0: #{tpu_custom_call.1}
  #allocation0 [shape = 'u32[]', space=smem, size = 0x4, offset = 0x4, fixed_abs, tag = 'smem constant byte address 0x4 - core index']
  #allocation1 [shape = 'u32[144,128]{1,0:T(1,128)}', space=vmem, size = 0x12000, scoped, tag = 'internal scratch']
  #allocation2 [shape = 'f32[3,2,128]{2,1,0:T(2,128)}', space=vmem, size = 0xc00, scoped, tag = 'scratch operand']
  %s0 = inlined_call_operand.vmem [shape: f32[2,18,128], index: 0, kind: input, shape index: {}]
  %s1 = inlined_call_operand.vmem [shape: f32[2,18,128], index: 1, kind: input, shape index: {}]
  %s2 = inlined_call_operand.vmem [shape: f32[1,1,3,2], index: 2, kind: output, shape index: {}]
  %s3 = sld [smem:[#allocation0]]
  $region125: #{tpu_custom_call.1} parent=0
    _
  %s5 = ssub.s32 1, %s3
  %s6 = scalar_select 0, %s5, %s3
  $region1: #{tpu_custom_call.1} parent=0
    #allocation3 [shape = 'u8[16384]{0}', space=vmem, size = 0x4000, scoped, tag = 'input window, operand 0']
    #allocation4 [shape = 'u8[16384]{0}', space=vmem, size = 0x4000, scoped, tag = 'input window, operand 1']
    loop: start=0, step=1, limit=5
    $region2: #{tpu_custom_call.1} parent=1 // loop_pre_header
      _
    $region3: #{tpu_custom_call.1} parent=1 // loop_header
      %s8 = sphi 0, %s12
      %p9 = scmp.ge.s32.totalorder %s8, 5
      %s15 = sphi 0, %s34
      %s16 = sphi 0, %s30
      %s17 = sphi 0, %s26
      %s18 = sphi 0, %s15
      %s19 = sphi 0, %s16
      %s20 = sphi 0, %s17
      %s21 = sphi 0, %s18
      %s22 = sphi 0, %s19
      %s23 = sphi 0, %s20
      %s43 = sphi 0, %s45
      %s46 = sphi 0, %s43
      %s47 = sphi 0, %s46
      %s63 = sphi 0, %s47
      %s75 = sphi 0, %s77
      %s78 = sphi 0, %s75
      %s79 = sphi 0, %s78
      %s95 = sphi 0, %s79
      %s103 = sphi 0, %s105
      %s106 = sphi 0, %s103
      %s107 = sphi 0, %s106
      %s123 = sphi 0, %s107
    $region4: #{tpu_custom_call.1} parent=1 // loop_header_branch
      %11 = sbr.rel (%p9) target = $region8
    $region5: #{tpu_custom_call.1} parent=1 // loop_body
      %s13 = ssub.s32 %s8, 1
      %s14 = ssub.s32 %s8, 2
      %s24 = sadd.s32 1, %s17
      %p25 = scmp.ge.s32.totalorder %s24, 3
      %s26 = scalar_select %p25, 0, %s24
      %s27 = sadd.s32 1, %s16
      %s28 = scalar_select %p25, %s27, %s16
      %p29 = scmp.ge.s32.totalorder %s28, 1
      %s30 = scalar_select %p29, 0, %s28
      %s31 = sadd.s32 1, %s15
      %s32 = scalar_select %p29, %s31, %s15
      %p33 = scmp.ge.s32.totalorder %s32, 1
      %s34 = scalar_select %p33, 0, %s32
      %s35 = smul.u32 %s15, 3
      %s36 = sadd.s32 %s35, %s17
      %s37 = smul.u32 %s34, 3
      %s38 = sadd.s32 %s37, %s26
      %s39 = ssub.s32 %s16, %s30
      %s40 = ssub.s32 %s36, %s38
      %s41 = sor.u32 %s39, %s40
      %p42 = scmp.eq.s32.totalorder %s41, 0
      %s44 = sadd.s32 %s43, 1
      %s45 = scalar_select %p42, %s43, %s44
      %p48 = pneg %p42
      %p49 = scmp.eq.s32.totalorder %s8, 2
      %p50 = por %p48, %p49
      %p51 = scmp.ne.s32.totalorder %s43, %s46
      %p52 = scmp.eq.s32.totalorder %s8, 0
      %p53 = por %p51, %p52
      %p54 = scmp.ne.s32.totalorder %s43, %s46
      %p55 = scmp.eq.s32.totalorder %s13, 2
      %p56 = por %p54, %p55
      %p57 = scmp.ne.s32.totalorder %s46, %s47
      %p58 = scmp.eq.s32.totalorder %s13, 0
      %p59 = por %p57, %p58
      %p60 = scmp.ne.s32.totalorder %s46, %s47
      %p61 = scmp.eq.s32.totalorder %s14, 2
      %p62 = por %p60, %p61
      %p64 = scmp.ne.s32.totalorder %s47, %s63
      %p65 = scmp.eq.s32.totalorder %s14, 0
      %p66 = por %p64, %p65
      %s67 = smul.u32 %s15, 3
      %s68 = sadd.s32 %s67, %s17
      %s69 = smul.u32 %s34, 3
      %s70 = sadd.s32 %s69, %s26
      %s71 = ssub.s32 %s16, %s30
      %s72 = ssub.s32 %s68, %s70
      %s73 = sor.u32 %s71, %s72
      %p74 = scmp.eq.s32.totalorder %s73, 0
      %s76 = sadd.s32 %s75, 1
      %s77 = scalar_select %p74, %s75, %s76
      %p80 = pneg %p74
      %p81 = scmp.eq.s32.totalorder %s8, 2
      %p82 = por %p80, %p81
      %p83 = scmp.ne.s32.totalorder %s75, %s78
      %p84 = scmp.eq.s32.totalorder %s8, 0
      %p85 = por %p83, %p84
      %p86 = scmp.ne.s32.totalorder %s75, %s78
      %p87 = scmp.eq.s32.totalorder %s13, 2
      %p88 = por %p86, %p87
      %p89 = scmp.ne.s32.totalorder %s78, %s79
      %p90 = scmp.eq.s32.totalorder %s13, 0
      %p91 = por %p89, %p90
      %p92 = scmp.ne.s32.totalorder %s78, %s79
      %p93 = scmp.eq.s32.totalorder %s14, 2
      %p94 = por %p92, %p93
      %p96 = scmp.ne.s32.totalorder %s79, %s95
      %p97 = scmp.eq.s32.totalorder %s14, 0
      %p98 = por %p96, %p97
      %s99 = ssub.s32 %s15, %s34
      %s100 = ssub.s32 %s16, %s30
      %s101 = sor.u32 %s99, %s100
      %p102 = scmp.eq.s32.totalorder %s101, 0
      %s104 = sadd.s32 %s103, 1
      %s105 = scalar_select %p102, %s103, %s104
      %p108 = pneg %p102
      %p109 = scmp.eq.s32.totalorder %s8, 2
      %p110 = por %p108, %p109
      %p111 = scmp.ne.s32.totalorder %s103, %s106
      %p112 = scmp.eq.s32.totalorder %s8, 0
      %p113 = por %p111, %p112
      %p114 = scmp.ne.s32.totalorder %s103, %s106
      %p115 = scmp.eq.s32.totalorder %s13, 2
      %p116 = por %p114, %p115
      %p117 = scmp.ne.s32.totalorder %s106, %s107
      %p118 = scmp.eq.s32.totalorder %s13, 0
      %p119 = por %p117, %p118
      %p120 = scmp.ne.s32.totalorder %s106, %s107
      %p121 = scmp.eq.s32.totalorder %s14, 2
      %p122 = por %p120, %p121
      %p124 = scmp.ne.s32.totalorder %s107, %s123
      %p125 = scmp.eq.s32.totalorder %s14, 0
      %p126 = por %p124, %p125
      %p127 = scmp.le.s32.totalorder 1, %s8
      %p128 = scmp.lt.s32.totalorder %s8, 4
      %p129 = pnand %p127, %p128
      %p130 = pneg %p129
      // Predicated region
      $region9: #{tpu_custom_call.1} parent=5 // pred_check
        _
      $region10: #{tpu_custom_call.1} parent=5 // pred_check_branch
        %132 = sbr.rel (%p129) target = $region12
      $region11: #{tpu_custom_call.1} parent=5 // pred_region
        %s133 = ssub.s32 %s8, 1
      $region12: #{tpu_custom_call.1} parent=5 // pred_fallthru
        _
      %p134 = scmp.lt.s32.totalorder %s8, 3
      // Predicated region
      $region13: #{tpu_custom_call.1} parent=5 // pred_check
        %p135 = pneg %p134
      $region14: #{tpu_custom_call.1} parent=5 // pred_check_branch
        %137 = sbr.rel (%p135) target = $region16
      $region15: #{tpu_custom_call.1} parent=5 // pred_region
        // Predicated region
        $region17: #{tpu_custom_call.1} parent=15 // pred_check
          %p138 = pneg %p53
        $region18: #{tpu_custom_call.1} parent=15 // pred_check_branch
          %140 = sbr.rel (%p138) target = $region20
        $region19: #{tpu_custom_call.1} parent=15 // pred_region
          %s141 = sand.u32 %s43, 1
          %s142 = sand.u32 %s43, 1
          %s143 = smul.addr %s142, 16
          %s144 = scalar_lea.vmem [#allocation3], %s143
          %s145 = smul.u32 %s15, 3
          %s146 = sadd.s32 %s145, %s17
          %s147 = smul.u32 2, %s16
          %s148 = smul.addr %s147, 3
          %s149 = sadd.s32 %s146, %s148
          %s150 = smul.addr %s149, 8
          %s151 = scalar_lea.vmem %s0, %s150
          // Predicated region
          $region21: #{tpu_custom_call.1} parent=19 // pred_check
            _
          $region22: #{tpu_custom_call.1} parent=19 // pred_check_branch
            %153 = sbr.rel (0) target = $region24
          $region23: #{tpu_custom_call.1} parent=19 // pred_region
            // Predicated region
            $region25: #{tpu_custom_call.1} parent=23 // pred_check
              _
            $region26: #{tpu_custom_call.1} parent=23 // pred_check_branch
              %155 = sbr.rel (0) target = $region28
            $region27: #{tpu_custom_call.1} parent=23 // pred_region
              // Predicated region
              $region40: #{tpu_custom_call.1} parent=27 // pred_check
                _
              $region41: #{tpu_custom_call.1} parent=27 // pred_check_branch
                %172 = sbr.rel (0) target = $region43
              $region42: #{tpu_custom_call.1} parent=27 // pred_region
                loop: start=0, step=1, limit=1
                $region44: #{tpu_custom_call.1} parent=42 // loop_pre_header
                  _
                $region45: #{tpu_custom_call.1} parent=42 // loop_header
                  %s174 = sphi 0, %s178
                  %p175 = scmp.ge.s32.totalorder %s174, 1
                  %s179 = sphi %s151, %s151
                  %s180 = sphi %s144, %s144
                $region46: #{tpu_custom_call.1} parent=42 // loop_header_branch
                  %177 = sbr.rel (%p175) target = $region50
                $region47: #{tpu_custom_call.1} parent=42 // loop_body
                  %v181 = vld [vmem:[%s179] sm:$0xff]
                  %182 = vst [vmem:[%s180] sm:$0xff] %v181
                  %v183 = vld [vmem:[%s179 + $0x18] sm:$0xff]
                  %184 = vst [vmem:[%s180 + $0x8] sm:$0xff] %v183
                $region48: #{tpu_custom_call.1} parent=42 // loop_footer
                  %s178 = sadd.s32 1, %s174
                $region49: #{tpu_custom_call.1} parent=42 // loop_footer_branch
                  %173 = sbr.rel target = $region45
                $region50: #{tpu_custom_call.1} parent=42 // loop_exit
                  _
              $region43: #{tpu_custom_call.1} parent=27 // pred_fallthru
                _
              // Predicated region
              $region51: #{tpu_custom_call.1} parent=27 // pred_check
                _
              $region52: #{tpu_custom_call.1} parent=27 // pred_check_branch
                %186 = sbr.rel target = $region54
              $region53: #{tpu_custom_call.1} parent=27 // pred_region
                _
              $region54: #{tpu_custom_call.1} parent=27 // pred_fallthru
                _
            $region28: #{tpu_custom_call.1} parent=23 // pred_fallthru
              _
            // Predicated region
            $region29: #{tpu_custom_call.1} parent=23 // pred_check
              _
            $region30: #{tpu_custom_call.1} parent=23 // pred_check_branch
              %157 = sbr.rel target = $region32
            $region31: #{tpu_custom_call.1} parent=23 // pred_region
              loop: start=0, step=1, limit=1
              $region33: #{tpu_custom_call.1} parent=31 // loop_pre_header
                _
              $region34: #{tpu_custom_call.1} parent=31 // loop_header
                %s160 = sphi 0, %s164
                %p161 = scmp.ge.s32.totalorder %s160, 1
                %s165 = sphi %s151, %s151
                %s166 = sphi %s144, %s144
              $region35: #{tpu_custom_call.1} parent=31 // loop_header_branch
                %163 = sbr.rel (%p161) target = $region39
              $region36: #{tpu_custom_call.1} parent=31 // loop_body
                %v167 = vld [vmem:[%s165] sm:$0xff]
                %168 = vst [vmem:[%s166] sm:$0xff] %v167
                %v169 = vld [vmem:[%s165 + $0x18] sm:$0xff]
                %170 = vst [vmem:[%s166 + $0x8] sm:$0xff] %v169
              $region37: #{tpu_custom_call.1} parent=31 // loop_footer
                %s164 = sadd.s32 1, %s160
              $region38: #{tpu_custom_call.1} parent=31 // loop_footer_branch
                %159 = sbr.rel target = $region34
              $region39: #{tpu_custom_call.1} parent=31 // loop_exit
                _
            $region32: #{tpu_custom_call.1} parent=23 // pred_fallthru
              _
          $region24: #{tpu_custom_call.1} parent=19 // pred_fallthru
            _
          %187 = vnop
        $region20: #{tpu_custom_call.1} parent=15 // pred_fallthru
          _
        // Predicated region
        $region55: #{tpu_custom_call.1} parent=15 // pred_check
          %p188 = pneg %p85
        $region56: #{tpu_custom_call.1} parent=15 // pred_check_branch
          %190 = sbr.rel (%p188) target = $region58
        $region57: #{tpu_custom_call.1} parent=15 // pred_region
          %s191 = sand.u32 %s75, 1
          %s192 = sand.u32 %s75, 1
          %s193 = smul.addr %s192, 16
          %s194 = scalar_lea.vmem [#allocation4], %s193
          %s195 = smul.u32 %s15, 3
          %s196 = sadd.s32 %s195, %s17
          %s197 = smul.u32 2, %s16
          %s198 = smul.addr %s197, 3
          %s199 = sadd.s32 %s196, %s198
          %s200 = smul.addr %s199, 8
          %s201 = scalar_lea.vmem %s1, %s200
          // Predicated region
          $region59: #{tpu_custom_call.1} parent=57 // pred_check
            _
          $region60: #{tpu_custom_call.1} parent=57 // pred_check_branch
            %203 = sbr.rel (0) target = $region62
          $region61: #{tpu_custom_call.1} parent=57 // pred_region
            // Predicated region
            $region63: #{tpu_custom_call.1} parent=61 // pred_check
              _
            $region64: #{tpu_custom_call.1} parent=61 // pred_check_branch
              %205 = sbr.rel (0) target = $region66
            $region65: #{tpu_custom_call.1} parent=61 // pred_region
              // Predicated region
              $region78: #{tpu_custom_call.1} parent=65 // pred_check
                _
              $region79: #{tpu_custom_call.1} parent=65 // pred_check_branch
                %222 = sbr.rel (0) target = $region81
              $region80: #{tpu_custom_call.1} parent=65 // pred_region
                loop: start=0, step=1, limit=1
                $region82: #{tpu_custom_call.1} parent=80 // loop_pre_header
                  _
                $region83: #{tpu_custom_call.1} parent=80 // loop_header
                  %s224 = sphi 0, %s228
                  %p225 = scmp.ge.s32.totalorder %s224, 1
                  %s229 = sphi %s201, %s201
                  %s230 = sphi %s194, %s194
                $region84: #{tpu_custom_call.1} parent=80 // loop_header_branch
                  %227 = sbr.rel (%p225) target = $region88
                $region85: #{tpu_custom_call.1} parent=80 // loop_body
                  %v231 = vld [vmem:[%s229] sm:$0xff]
                  %232 = vst [vmem:[%s230] sm:$0xff] %v231
                  %v233 = vld [vmem:[%s229 + $0x18] sm:$0xff]
                  %234 = vst [vmem:[%s230 + $0x8] sm:$0xff] %v233
                $region86: #{tpu_custom_call.1} parent=80 // loop_footer
                  %s228 = sadd.s32 1, %s224
                $region87: #{tpu_custom_call.1} parent=80 // loop_footer_branch
                  %223 = sbr.rel target = $region83
                $region88: #{tpu_custom_call.1} parent=80 // loop_exit
                  _
              $region81: #{tpu_custom_call.1} parent=65 // pred_fallthru
                _
              // Predicated region
              $region89: #{tpu_custom_call.1} parent=65 // pred_check
                _
              $region90: #{tpu_custom_call.1} parent=65 // pred_check_branch
                %236 = sbr.rel target = $region92
              $region91: #{tpu_custom_call.1} parent=65 // pred_region
                _
              $region92: #{tpu_custom_call.1} parent=65 // pred_fallthru
                _
            $region66: #{tpu_custom_call.1} parent=61 // pred_fallthru
              _
            // Predicated region
            $region67: #{tpu_custom_call.1} parent=61 // pred_check
              _
            $region68: #{tpu_custom_call.1} parent=61 // pred_check_branch
              %207 = sbr.rel target = $region70
            $region69: #{tpu_custom_call.1} parent=61 // pred_region
              loop: start=0, step=1, limit=1
              $region71: #{tpu_custom_call.1} parent=69 // loop_pre_header
                _
              $region72: #{tpu_custom_call.1} parent=69 // loop_header
                %s210 = sphi 0, %s214
                %p211 = scmp.ge.s32.totalorder %s210, 1
                %s215 = sphi %s201, %s201
                %s216 = sphi %s194, %s194
              $region73: #{tpu_custom_call.1} parent=69 // loop_header_branch
                %213 = sbr.rel (%p211) target = $region77
              $region74: #{tpu_custom_call.1} parent=69 // loop_body
                %v217 = vld [vmem:[%s215] sm:$0xff]
                %218 = vst [vmem:[%s216] sm:$0xff] %v217
                %v219 = vld [vmem:[%s215 + $0x18] sm:$0xff]
                %220 = vst [vmem:[%s216 + $0x8] sm:$0xff] %v219
              $region75: #{tpu_custom_call.1} parent=69 // loop_footer
                %s214 = sadd.s32 1, %s210
              $region76: #{tpu_custom_call.1} parent=69 // loop_footer_branch
                %209 = sbr.rel target = $region72
              $region77: #{tpu_custom_call.1} parent=69 // loop_exit
                _
            $region70: #{tpu_custom_call.1} parent=61 // pred_fallthru
              _
          $region62: #{tpu_custom_call.1} parent=57 // pred_fallthru
            _
          %237 = vnop
        $region58: #{tpu_custom_call.1} parent=15 // pred_fallthru
          _
      $region16: #{tpu_custom_call.1} parent=5 // pred_fallthru
        _
      %p238 = scmp.le.s32.totalorder 1, %s8
      %p239 = scmp.lt.s32.totalorder %s8, 4
      %p240 = pnand %p238, %p239
      %p241 = pneg %p240
      // Predicated region
      $region93: #{tpu_custom_call.1} parent=5 // pred_check
        _
      $region94: #{tpu_custom_call.1} parent=5 // pred_check_branch
        %243 = sbr.rel (%p240) target = $region96
      $region95: #{tpu_custom_call.1} parent=5 // pred_region
        %s244 = ssub.s32 %s8, 1
        %s245 = sand.u32 %s46, 1
        %s246 = sand.u32 %s46, 1
        %s247 = smul.addr %s246, 16
        %s248 = scalar_lea.vmem [#allocation3], %s247
        // Predicated region
        $region97: #{tpu_custom_call.1} parent=95 // pred_check
          %p249 = pneg %p59
        $region98: #{tpu_custom_call.1} parent=95 // pred_check_branch
          %251 = sbr.rel (%p249) target = $region100
        $region99: #{tpu_custom_call.1} parent=95 // pred_region
          _
        $region100: #{tpu_custom_call.1} parent=95 // pred_fallthru
          _
        %s252 = sand.u32 %s78, 1
        %s253 = sand.u32 %s78, 1
        %s254 = smul.addr %s253, 16
        %s255 = scalar_lea.vmem [#allocation4], %s254
        // Predicated region
        $region101: #{tpu_custom_call.1} parent=95 // pred_check
          %p256 = pneg %p91
        $region102: #{tpu_custom_call.1} parent=95 // pred_check_branch
          %258 = sbr.rel (%p256) target = $region104
        $region103: #{tpu_custom_call.1} parent=95 // pred_region
          _
        $region104: #{tpu_custom_call.1} parent=95 // pred_fallthru
          _
        %s259 = sand.u32 %s46, 1
        %s260 = sand.u32 %s46, 1
        %s261 = smul.addr %s260, 16
        %s262 = scalar_lea.vmem [#allocation3], %s261
        %p263 = pneg %p59
        %p264 = pneg %p56
        %s265 = sand.u32 %s78, 1
        %s266 = sand.u32 %s78, 1
        %s267 = smul.addr %s266, 16
        %s268 = scalar_lea.vmem [#allocation4], %s267
        %p269 = pneg %p91
        %p270 = pneg %p88
        %p271 = pneg %p119
        %p272 = pneg %p116
        %p273 = scmp.lt.s32.totalorder %s18, 0
        %s274 = scalar_select %p273, %s18, 0
        %p275 = scmp.lt.s32.totalorder %s19, 0
        %s276 = scalar_select %p275, %s19, 0
        %s277 = sadd.s32 %s276, %s274
        %s278 = smul.addr %s277, 4
        %s279 = scalar_lea.vmem %s2, %s278
        %s280 = smul.u32 %s18, 3
        %s281 = sadd.s32 %s280, %s20
        %s282 = smul.u32 2, %s19
        %s283 = smul.u32 %s18, 3
        %s284 = sadd.s32 %s283, %s20
        %s285 = smul.u32 2, %s19
        %p286 = scmp.lt.s32.totalorder %s18, 0
        %s287 = scalar_select %p286, %s18, 0
        %p288 = scmp.lt.s32.totalorder %s19, 0
        %s289 = scalar_select %p288, %s19, 0
        %s290 = sadd.s32 %s289, %s287
        %s291 = smul.addr %s290, 4
        %s292 = scalar_lea.vmem %s2, %s291
        %p293 = scmp.eq.s32.totalorder %s20, 0
        // Predicated region
        $region105: #{tpu_custom_call.1} parent=95 // pred_check
          %p294 = pneg %p293
        $region106: #{tpu_custom_call.1} parent=95 // pred_check_branch
          %296 = sbr.rel (%p294) target = $region108
        $region107: #{tpu_custom_call.1} parent=95 // pred_region
          %297 = vst [vmem:[#allocation2] sm:$0x3] 0.0
          %298 = vst [vmem:[#allocation2 + $0x2] sm:$0x3] 0.0
          %299 = vst [vmem:[#allocation2 + $0x4] sm:$0x3] 0.0
        $region108: #{tpu_custom_call.1} parent=95 // pred_fallthru
          _
        %v300 = vld [vmem:[%s248] sm:$0xff]
        %v301 = vld [vmem:[%s248 + $0x8] sm:$0xff]
        %v302 = vld [vmem:[%s255] sm:$0xff]
        %v303 = vld [vmem:[%s255 + $0x8] sm:$0xff]
        %s304 = smul.u32 %s18, 3
        %s305 = sadd.s32 %s304, %s20
        %s306 = smul.u32 %s305, 8
        %v307 = vlaneseq
        %v308 = vshrl.u32 %v307, 7
        %v309 = vstv %s306
        %v310 = vadd.s32 %v308, %v309
        %vm311 = vcmp.lt.s32.totalorder %v310, 18
        %v312 = vsel %vm311, %v300, 0.0
        %v313 = vsel %vm311, %v301, 0.0
        %v314 = vsel %vm311, %v302, 0.0
        %v315 = vsel %vm311, %v303, 0.0
        %v316 = vld [vmem:[#allocation2] sm:$0x3]
        %v317 = vmul.f32 %v312, %v314
        %v318 = vmul.f32 %v313, %v315
        %v319 = vrot.slane %v317, 4
        %v320 = vadd.f32 %v317, %v319
        %v321 = vrot.slane %v320, 2
        %v322 = vadd.f32 %v320, %v321
        %v323 = vrot.slane %v322, 1
        %v324 = vadd.f32 %v322, %v323
        %v325 = vrot.slane %v318, 4
        %v326 = vadd.f32 %v318, %v325
        %v327 = vrot.slane %v326, 2
        %v328 = vadd.f32 %v326, %v327
        %v329 = vrot.slane %v328, 1
        %v330 = vadd.f32 %v328, %v329
        %vm333 = vcmask 1041409
        %v334 = vsel %vm333, %v330, %v324
        %v336 = vadd.f32 %v316, %v334
        %337 = vst [vmem:[#allocation2] sm:$0x3] %v336
        %s338 = scalar_lea.vmem [#allocation2], 2
        %v339 = vld [vmem:[%s338] sm:$0x3]
        %v340 = vmul.f32 %v312, %v312
        %v341 = vmul.f32 %v313, %v313
        %v342 = vrot.slane %v340, 4
        %v343 = vadd.f32 %v340, %v342
        %v344 = vrot.slane %v343, 2
        %v345 = vadd.f32 %v343, %v344
        %v346 = vrot.slane %v345, 1
        %v347 = vadd.f32 %v345, %v346
        %v348 = vrot.slane %v341, 4
        %v349 = vadd.f32 %v341, %v348
        %v350 = vrot.slane %v349, 2
        %v351 = vadd.f32 %v349, %v350
        %v352 = vrot.slane %v351, 1
        %v353 = vadd.f32 %v351, %v352
        %v356 = vsel %vm333, %v353, %v347
        %v358 = vadd.f32 %v339, %v356
        %359 = vst [vmem:[%s338] sm:$0x3] %v358
        %s360 = scalar_lea.vmem [#allocation2], 4
        %v361 = vld [vmem:[%s360] sm:$0x3]
        %v362 = vmul.f32 %v314, %v314
        %v363 = vmul.f32 %v315, %v315
        %v364 = vrot.slane %v362, 4
        %v365 = vadd.f32 %v362, %v364
        %v366 = vrot.slane %v365, 2
        %v367 = vadd.f32 %v365, %v366
        %v368 = vrot.slane %v367, 1
        %v369 = vadd.f32 %v367, %v368
        %v370 = vrot.slane %v363, 4
        %v371 = vadd.f32 %v363, %v370
        %v372 = vrot.slane %v371, 2
        %v373 = vadd.f32 %v371, %v372
        %v374 = vrot.slane %v373, 1
        %v375 = vadd.f32 %v373, %v374
        %v378 = vsel %vm333, %v375, %v369
        %v380 = vadd.f32 %v361, %v378
        %381 = vst [vmem:[%s360] sm:$0x3] %v380
        %p382 = scmp.eq.s32.totalorder %s20, 2
        // Predicated region
        $region109: #{tpu_custom_call.1} parent=95 // pred_check
          %p383 = pneg %p382
        $region110: #{tpu_custom_call.1} parent=95 // pred_check_branch
          %385 = sbr.rel (%p383) target = $region112
        $region111: #{tpu_custom_call.1} parent=95 // pred_region
          %v386 = vld [vmem:[#allocation2] sm:$0x3]
          %v387 = vld [vmem:[#allocation2 + $0x2] sm:$0x3]
          %v388 = vld [vmem:[#allocation2 + $0x4] sm:$0x3]
          %vm389 = vcmask 1041408
          %v390 = vsel %vm389, %v386, 0.0
          %391 = vadd.xlane.f32.xlu0 %v390
          %v392 = vpop.xlane.xlu0 %391
          %v393 = vsel %vm389, %v387, 0.0
          %394 = vadd.xlane.f32.xlu0 %v393
          %v395 = vpop.xlane.xlu0 %394
          %v396 = vsel %vm389, %v388, 0.0
          %397 = vadd.xlane.f32.xlu0 %v396
          %v398 = vpop.xlane.xlu0 %397
          %v402 = vlaneseq
          %v403 = vand.u32 %v402, 127
          %v404 = vlaneseq
          %v405 = vshrl.u32 %v404, 7
          %v406 = vsub.s32 %v403, %v405
          %v407 = vrot.slane %v392, %v406
          %v408 = vlaneseq
          %v409 = vshrl.u32 %v408, 7
          %v410 = vsub.s32 %v403, %v409
          %v411 = vrot.slane %v395, %v410
          %v412 = vlaneseq
          %v413 = vshrl.u32 %v412, 7
          %v414 = vsub.s32 %v403, %v413
          %v415 = vrot.slane %v398, %v414
          %v416 = vsel %vm333, %v411, %v407
          %vm417 = vcmask 1042434
          %v418 = vsel %vm417, %v415, %v416
          %vm420 = vcmask 10240
          %421 = vst.msk [vmem:[%s292] sm:$0x7] %vm420, %v418
        $region112: #{tpu_custom_call.1} parent=95 // pred_fallthru
          _
        %p422 = scmp.lt.s32.totalorder %s18, 0
        %s423 = scalar_select %p422, %s18, 0
        %p424 = scmp.lt.s32.totalorder %s19, 0
        %s425 = scalar_select %p424, %s19, 0
        %s426 = sadd.s32 %s425, %s423
        %s427 = smul.addr %s426, 4
        %s428 = scalar_lea.vmem %s2, %s427
        // Predicated region
        $region113: #{tpu_custom_call.1} parent=95 // pred_check
          %p429 = pneg %p116
        $region114: #{tpu_custom_call.1} parent=95 // pred_check_branch
          %431 = sbr.rel (%p429) target = $region116
        $region115: #{tpu_custom_call.1} parent=95 // pred_region
          _
        $region116: #{tpu_custom_call.1} parent=95 // pred_fallthru
          _
        // Predicated region
        $region117: #{tpu_custom_call.1} parent=95 // pred_check
          %p432 = pneg %p116
        $region118: #{tpu_custom_call.1} parent=95 // pred_check_branch
          %434 = sbr.rel (%p432) target = $region120
        $region119: #{tpu_custom_call.1} parent=95 // pred_region
          %p435 = scmp.lt.s32.totalorder %s18, 0
          %s436 = scalar_select %p435, %s18, 0
          %p437 = scmp.lt.s32.totalorder %s19, 0
          %s438 = scalar_select %p437, %s19, 0
          %s439 = sadd.s32 %s438, %s436
          %s440 = smul.addr %s439, 4
          %s441 = scalar_lea.vmem %s2, %s440
        $region120: #{tpu_custom_call.1} parent=95 // pred_fallthru
          _
      $region96: #{tpu_custom_call.1} parent=5 // pred_fallthru
        _
      %p442 = scmp.le.s32.totalorder 2, %s8
      // Predicated region
      $region121: #{tpu_custom_call.1} parent=5 // pred_check
        %p443 = pneg %p442
      $region122: #{tpu_custom_call.1} parent=5 // pred_check_branch
        %445 = sbr.rel (%p443) target = $region124
      $region123: #{tpu_custom_call.1} parent=5 // pred_region
        %s446 = ssub.s32 %s8, 2
      $region124: #{tpu_custom_call.1} parent=5 // pred_fallthru
        _
    $region6: #{tpu_custom_call.1} parent=1 // loop_footer
      %s12 = sadd.s32 1, %s8
    $region7: #{tpu_custom_call.1} parent=1 // loop_footer_branch
      %7 = sbr.rel target = $region3
    $region8: #{tpu_custom_call.1} parent=1 // loop_exit
      _

</llo_original>
